<compile_context>
chip_gen: v7x
topology: tpu7x:2x2x1
jax: 0.10.0
libtpu: 0.0.40
codegen_flags: <defaults>
</compile_context>

<pallas_src>
import functools

import jax
import jax.numpy as jnp
from jax import lax
from jax.experimental import pallas as pl
from jax.experimental.pallas import tpu as pltpu


def _round_up(x: int, m: int) -> int:
    return ((x + m - 1) // m) * m


def _vmem_capacity_bytes() -> int:
    """Per-TensorCore VMEM capacity; conservative (v7x) fallback."""
    try:
        cap = getattr(pltpu.get_tpu_info(), "vmem_capacity_bytes", None)
        if cap:
            return int(cap)
    except Exception:
        pass
    return 64 * 1024 * 1024


def _poly_kernel(x_ref, y_ref, o_ref, *, degree: int, nk: int):
    """One grid step.

    x_ref: (tn, tk) tile of X^T, y_ref: (tk, tm) tile of Y.
    Accumulates directly into the resident f32 output tile; applies the
    elementwise integer power in place on the last K step.
    """
    acc = jnp.dot(x_ref[...], y_ref[...], preferred_element_type=jnp.float32)

    if nk == 1:
        # Common case (D fits in one K tile): no zero-init, no RMW, no pl.when.
        o_ref[...] = lax.integer_pow(acc, degree)
    else:
        k = pl.program_id(2)

        @pl.when(k == 0)
        def _():
            o_ref[...] = acc          # direct write: no zero sweep + RMW

        @pl.when(k > 0)
        def _():
            o_ref[...] += acc

        @pl.when(k == nk - 1)
        def _():
            o_ref[...] = lax.integer_pow(o_ref[...], degree)


def poly_kernel(x, y=None, *, degree: int = 3, use_bf16: bool = False):
    """Pallas implementation of PolyKernelTorch(d=degree).forward(X, Y)."""
    if y is None:
        y = x
    x = jnp.asarray(x, jnp.float32)
    y = jnp.asarray(y, jnp.float32)
    # "1-D input means a single observation" (column vector), as in the module.
    if x.ndim == 1:
        x = x[:, None]
    if y.ndim == 1:
        y = y[:, None]

    D, N = x.shape
    D2, M = y.shape
    assert D == D2, "feature dims must match"

    # ---- operand dtype: cast in the wrapper so the DMA moves narrow data ----
    in_dtype = jnp.bfloat16 if use_bf16 else jnp.float32
    in_itemsize = 2 if use_bf16 else 4

    # Pre-transpose X once so the kernel runs the canonical (tn,tk)x(tk,tm)
    # matmul (no per-step XLU transpose of the LHS tile).
    x_t = x.T.astype(in_dtype)      # (N, D)
    y = y.astype(in_dtype)          # (D, M)

    # ---- tile selection -----------------------------------------------------
    # Output tiles: up to 1024, multiple of 128 (lane-dense unmasked stores).
    tn = min(1024, _round_up(N, 128))
    tm = min(1024, _round_up(M, 128))
    Np = _round_up(N, tn)
    Mp = _round_up(M, tm)

    # Give the parallel (i, j) grid at least two tiles when possible so the
    # two TensorCores on v7x (megacore sharding generally) both get work.
    if (Np // tn) * (Mp // tm) < 2:
        if Mp >= Np and Mp >= 256:
            tm = _round_up((Mp + 1) // 2, 128)
            Mp = _round_up(M, tm)
        elif Np >= 256:
            tn = _round_up((Np + 1) // 2, 128)
            Np = _round_up(N, tn)

    # K tile: whole feature dim (128-aligned, lane dim of the X^T tile) when it
    # fits in one 1024-wide tile; otherwise balanced ~1024 tiles so the K grid
    # is short and D is never over-padded by more than one 128 block.
    d128 = _round_up(D, 128)
    if d128 <= 1024:
        tk = d128
        nk = 1
    else:
        nk = (D + 1023) // 1024
        tk = _round_up((D + nk - 1) // nk, 128)
    Dp = nk * tk

    # ---- zero-pad to tile multiples (exact for D; N/M padding sliced off) ---
    if (Np, Dp) != (N, D):
        x_t = jnp.pad(x_t, ((0, Np - N), (0, Dp - D)))
    if (Dp, Mp) != (D, M):
        y = jnp.pad(y, ((0, Dp - D), (0, Mp - M)))

    grid = (Np // tn, Mp // tm, nk)

    # ---- VMEM request: real tile budget, capped for the running generation --
    budget = 2 * (tn * tk + tk * tm) * in_itemsize + 2 * tn * tm * 4
    vmem_cap = _vmem_capacity_bytes()
    vmem_limit = int(min(0.75 * vmem_cap,
                         max(32 * 1024 * 1024, 1.5 * budget)))

    cost = pl.CostEstimate(
        flops=int(2 * Np * Mp * Dp + (max(degree, 1) - 1) * Np * Mp),
        transcendentals=0,
        bytes_accessed=int(
            grid[1] * Np * Dp * in_itemsize      # X^T re-read per j tile
            + grid[0] * Mp * Dp * in_itemsize    # Y re-read per i tile
            + Np * Mp * 4                        # output written once
        ),
    )

    out = pl.pallas_call(
        functools.partial(_poly_kernel, degree=degree, nk=nk),
        out_shape=jax.ShapeDtypeStruct((Np, Mp), jnp.float32),
        grid_spec=pltpu.PrefetchScalarGridSpec(
            num_scalar_prefetch=0,
            grid=grid,
            in_specs=[
                # X^T tile: rows = observations (i), cols = features (k)
                pl.BlockSpec((tn, tk), lambda i, j, k: (i, k)),
                # Y tile: rows = features (k), cols = observations (j)
                pl.BlockSpec((tk, tm), lambda i, j, k: (k, j)),
            ],
            out_specs=pl.BlockSpec((tn, tm), lambda i, j, k: (i, j)),
        ),
        compiler_params=pltpu.CompilerParams(
            dimension_semantics=("parallel", "parallel", "arbitrary"),
            vmem_limit_bytes=vmem_limit,
        ),
        cost_estimate=cost,
    )(x_t, y)

    if (Np, Mp) != (N, M):
        out = out[:N, :M]
    return out


if __name__ == "__main__":
    key = jax.random.PRNGKey(0)
    kx, ky = jax.random.split(key)

    # Small shapes; N/M deliberately not tile-aligned to exercise pad + slice.
    D, N, M = 32, 200, 300
    degree = 3

    X = jax.random.normal(kx, (D, N), dtype=jnp.float32)
    Y = jax.random.normal(ky, (D, M), dtype=jnp.float32)

    # f32 path (default): tight tolerance vs plain JAX reference.
    out = jax.block_until_ready(poly_kernel(X, Y, degree=degree))
    ref = jnp.power(X.T @ Y, degree)
    assert out.shape == (N, M)
    assert jnp.allclose(out, ref, rtol=1e-4, atol=1e-4), "mismatch vs reference"

    # Y defaults to X (symmetric Gram matrix).
    out_xx = jax.block_until_ready(poly_kernel(X, degree=degree))
    ref_xx = jnp.power(X.T @ X, degree)
    assert jnp.allclose(out_xx, ref_xx, rtol=1e-4, atol=1e-4), "X-only mismatch"

    # bf16 fast path (wrapper-side cast -> half DMA bytes, MXU-native matmul,
    # f32 accumulation). Degree amplifies input rounding, so check norm-wise.
    out_bf = jax.block_until_ready(poly_kernel(X, Y, degree=degree, use_bf16=True))
    rel = jnp.linalg.norm(out_bf - ref) / jnp.linalg.norm(ref)
    assert rel < 2e-2, f"bf16 path relative error too large: {rel}"

    print("KERNEL_OK")
</pallas_src>

<mosaic_0001>
module attributes {stable_mosaic.version = 11 : i64} {
  func.func @_poly_kernel(%arg0: i32, %arg1: i32, %arg2: i32, %arg3: memref<256x128xf32, #tpu.memory_space<vmem>>, %arg4: memref<128x256xf32, #tpu.memory_space<vmem>>, %arg5: memref<256x256xf32, #tpu.memory_space<vmem>>) attributes {dimension_semantics = [#tpu.dimension_semantics<parallel>, #tpu.dimension_semantics<parallel>, #tpu.dimension_semantics<arbitrary>], iteration_bounds = array<i64: 1, 2, 1>, scalar_prefetch = 0 : i64, scratch_operands = 0 : i64, tpu.core_type = #tpu.core_type<tc>, window_params = [{transform_indices = @transform_0, window_bounds = array<i64: 256, 128>}, {transform_indices = @transform_1, window_bounds = array<i64: 128, 256>}, {transform_indices = @transform_2, window_bounds = array<i64: 256, 256>}]} {
    %c0 = arith.constant 0 : index
    %c0_0 = arith.constant 0 : index
    %0 = vector.load %arg3[%c0, %c0_0] : memref<256x128xf32, #tpu.memory_space<vmem>>, vector<256x128xf32>
    %c0_1 = arith.constant 0 : index
    %c0_2 = arith.constant 0 : index
    %1 = vector.load %arg4[%c0_1, %c0_2] : memref<128x256xf32, #tpu.memory_space<vmem>>, vector<128x256xf32>
    %cst = arith.constant dense<0.000000e+00> : vector<256x256xf32>
    %2 = tpu.matmul %0, %1, %cst {dimension_numbers = #tpu.dot_dimension_numbers<[1], [0], [0], [1], [0, 0, 1, 1], [], []>} : vector<256x128xf32>, vector<128x256xf32>, vector<256x256xf32> -> vector<256x256xf32>
    %3 = arith.mulf %2, %2 : vector<256x256xf32>
    %4 = arith.mulf %2, %3 : vector<256x256xf32>
    %c0_3 = arith.constant 0 : index
    %c0_4 = arith.constant 0 : index
    %5 = vector.load %arg5[%c0_3, %c0_4] : memref<256x256xf32, #tpu.memory_space<vmem>>, vector<256x256xf32>
    tpu.vector_store %arg5[%c0_3, %c0_4], %4 {strides = array<i32>} : memref<256x256xf32, #tpu.memory_space<vmem>>, vector<256x256xf32>,
    return
  }
  func.func @transform_0(%arg0: i32, %arg1: i32, %arg2: i32) -> (i32, i32) {
    %c0_i32 = arith.constant 0 : i32
    return %arg0, %arg2 : i32, i32
  }
  func.func @transform_1(%arg0: i32, %arg1: i32, %arg2: i32) -> (i32, i32) {
    %c0_i32 = arith.constant 0 : i32
    return %arg2, %arg1 : i32, i32
  }
  func.func @transform_2(%arg0: i32, %arg1: i32, %arg2: i32) -> (i32, i32) {
    %c0_i32 = arith.constant 0 : i32
    return %arg0, %arg1 : i32, i32
  }
}

</mosaic_0001>

<llo_original>
// kernel: tpu_custom_call.1
$region0: #{tpu_custom_call.1}
  #allocation0 [shape = 'u32[]', space=smem, size = 0x4, offset = 0x4, fixed_abs, tag = 'smem constant byte address 0x4 - core index']
  #allocation1 [shape = 'u32[144,128]{1,0:T(1,128)}', space=vmem, size = 0x12000, scoped, tag = 'internal scratch']
  %s0 = inlined_call_operand.hbm [shape: f32[256,128], index: 0, kind: input, shape index: {}]
  %s1 = inlined_call_operand.hbm [shape: f32[128,512], index: 1, kind: input, shape index: {}]
  %s2 = inlined_call_operand.hbm [shape: f32[256,512], index: 2, kind: output, shape index: {}]
  %s3 = sld [smem:[#allocation0]]
  $region49: #{tpu_custom_call.1} parent=0
    _
  %s5 = ssub.s32 1, %s3
  %s6 = scalar_select 0, %s5, %s3
  $region1: #{tpu_custom_call.1} parent=0
    #allocation2 [shape = 'u8[131072]{0}', space=vmem, size = 0x20000, scoped, tag = 'input window, operand 0, single buffered']
    #allocation3 [shape = 's32[2]{0}', space=sflag, size = 0x8, scoped, tag = 'scoped memory for tpu_custom_call.1']
    #allocation4 [shape = 's32[2]{0}', space=sflag, size = 0x8, scoped, tag = 'scoped memory for tpu_custom_call.1']
    #allocation5 [shape = 'u8[262144]{0}', space=vmem, size = 0x40000, scoped, tag = 'input window, operand 1']
    #allocation6 [shape = 's32[2]{0}', space=sflag, size = 0x8, scoped, tag = 'scoped memory for tpu_custom_call.1']
    #allocation7 [shape = 'u8[524288]{0}', space=vmem, size = 0x80000, scoped, tag = 'output window, operand 0']
    %7 = vsyncpa [#allocation3], 0
    %8 = vsyncpa [#allocation6], 0
    %s9 = scalar_lea.sflag [#allocation6], 1
    %10 = vsyncpa %s9, 0
    %11 = vsyncpa [#allocation4], 0
    %s12 = scalar_lea.sflag [#allocation4], 1
    %13 = vsyncpa %s12, 0
    loop: start=0, step=1, limit=4
    $region2: #{tpu_custom_call.1} parent=1 // loop_pre_header
      _
    $region3: #{tpu_custom_call.1} parent=1 // loop_header
      %s15 = sphi 0, %s19
      %p16 = scmp.ge.s32.totalorder %s15, 4
      %s22 = sphi 0, %s41
      %s23 = sphi 0, %s37
      %s24 = sphi 0, %s33
      %s25 = sphi 0, %s22
      %s26 = sphi 0, %s23
      %s27 = sphi 0, %s24
      %s28 = sphi 0, %s25
      %s29 = sphi 0, %s26
      %s30 = sphi 0, %s27
      %s46 = sphi 0, %s48
      %s49 = sphi 0, %s46
      %s50 = sphi 0, %s49
      %s66 = sphi 0, %s50
      %s74 = sphi 0, %s76
      %s77 = sphi 0, %s74
      %s78 = sphi 0, %s77
      %s94 = sphi 0, %s78
      %s102 = sphi 0, %s104
      %s105 = sphi 0, %s102
      %s106 = sphi 0, %s105
      %s122 = sphi 0, %s106
    $region4: #{tpu_custom_call.1} parent=1 // loop_header_branch
      %18 = sbr.rel (%p16) target = $region8
    $region5: #{tpu_custom_call.1} parent=1 // loop_body
      %s20 = ssub.s32 %s15, 1
      %s21 = ssub.s32 %s15, 2
      %s31 = sadd.s32 1, %s24
      %p32 = scmp.ge.s32.totalorder %s31, 1
      %s33 = scalar_select %p32, 0, %s31
      %s34 = sadd.s32 1, %s23
      %s35 = scalar_select %p32, %s34, %s23
      %p36 = scmp.ge.s32.totalorder %s35, 2
      %s37 = scalar_select %p36, 0, %s35
      %s38 = sadd.s32 1, %s22
      %s39 = scalar_select %p36, %s38, %s22
      %p40 = scmp.ge.s32.totalorder %s39, 1
      %s41 = scalar_select %p40, 0, %s39
      %s42 = ssub.s32 %s22, %s41
      %s43 = ssub.s32 %s24, %s33
      %s44 = sor.u32 %s42, %s43
      %p45 = scmp.eq.s32.totalorder %s44, 0
      %s47 = sadd.s32 %s46, 1
      %s48 = scalar_select %p45, %s46, %s47
      %p51 = pneg %p45
      %p52 = scmp.eq.s32.totalorder %s15, 1
      %p53 = por %p51, %p52
      %p54 = scmp.ne.s32.totalorder %s46, %s49
      %p55 = scmp.eq.s32.totalorder %s15, 0
      %p56 = por %p54, %p55
      %p57 = scmp.ne.s32.totalorder %s46, %s49
      %p58 = scmp.eq.s32.totalorder %s20, 1
      %p59 = por %p57, %p58
      %p60 = scmp.ne.s32.totalorder %s49, %s50
      %p61 = scmp.eq.s32.totalorder %s20, 0
      %p62 = por %p60, %p61
      %p63 = scmp.ne.s32.totalorder %s49, %s50
      %p64 = scmp.eq.s32.totalorder %s21, 1
      %p65 = por %p63, %p64
      %p67 = scmp.ne.s32.totalorder %s50, %s66
      %p68 = scmp.eq.s32.totalorder %s21, 0
      %p69 = por %p67, %p68
      %s70 = ssub.s32 %s24, %s33
      %s71 = ssub.s32 %s23, %s37
      %s72 = sor.u32 %s70, %s71
      %p73 = scmp.eq.s32.totalorder %s72, 0
      %s75 = sadd.s32 %s74, 1
      %s76 = scalar_select %p73, %s74, %s75
      %p79 = pneg %p73
      %p80 = scmp.eq.s32.totalorder %s15, 1
      %p81 = por %p79, %p80
      %p82 = scmp.ne.s32.totalorder %s74, %s77
      %p83 = scmp.eq.s32.totalorder %s15, 0
      %p84 = por %p82, %p83
      %p85 = scmp.ne.s32.totalorder %s74, %s77
      %p86 = scmp.eq.s32.totalorder %s20, 1
      %p87 = por %p85, %p86
      %p88 = scmp.ne.s32.totalorder %s77, %s78
      %p89 = scmp.eq.s32.totalorder %s20, 0
      %p90 = por %p88, %p89
      %p91 = scmp.ne.s32.totalorder %s77, %s78
      %p92 = scmp.eq.s32.totalorder %s21, 1
      %p93 = por %p91, %p92
      %p95 = scmp.ne.s32.totalorder %s78, %s94
      %p96 = scmp.eq.s32.totalorder %s21, 0
      %p97 = por %p95, %p96
      %s98 = ssub.s32 %s22, %s41
      %s99 = ssub.s32 %s23, %s37
      %s100 = sor.u32 %s98, %s99
      %p101 = scmp.eq.s32.totalorder %s100, 0
      %s103 = sadd.s32 %s102, 1
      %s104 = scalar_select %p101, %s102, %s103
      %p107 = pneg %p101
      %p108 = scmp.eq.s32.totalorder %s15, 1
      %p109 = por %p107, %p108
      %p110 = scmp.ne.s32.totalorder %s102, %s105
      %p111 = scmp.eq.s32.totalorder %s15, 0
      %p112 = por %p110, %p111
      %p113 = scmp.ne.s32.totalorder %s102, %s105
      %p114 = scmp.eq.s32.totalorder %s20, 1
      %p115 = por %p113, %p114
      %p116 = scmp.ne.s32.totalorder %s105, %s106
      %p117 = scmp.eq.s32.totalorder %s20, 0
      %p118 = por %p116, %p117
      %p119 = scmp.ne.s32.totalorder %s105, %s106
      %p120 = scmp.eq.s32.totalorder %s21, 1
      %p121 = por %p119, %p120
      %p123 = scmp.ne.s32.totalorder %s106, %s122
      %p124 = scmp.eq.s32.totalorder %s21, 0
      %p125 = por %p123, %p124
      %p126 = scmp.le.s32.totalorder 1, %s15
      %p127 = scmp.lt.s32.totalorder %s15, 3
      %p128 = pnand %p126, %p127
      %p129 = pneg %p128
      // Predicated region
      $region9: #{tpu_custom_call.1} parent=5 // pred_check
        _
      $region10: #{tpu_custom_call.1} parent=5 // pred_check_branch
        %131 = sbr.rel (%p128) target = $region12
      $region11: #{tpu_custom_call.1} parent=5 // pred_region
        %s132 = ssub.s32 %s15, 1
        // Predicated region
        $region13: #{tpu_custom_call.1} parent=11 // pred_check
          %p133 = pneg %p62
        $region14: #{tpu_custom_call.1} parent=11 // pred_check_branch
          %135 = sbr.rel (%p133) target = $region16
        $region15: #{tpu_custom_call.1} parent=11 // pred_region
          %s136 = smul.u32 32, %s25
          %s138 = ssub.s32 4096, 4096
          %139 = vsyncadd [#allocation3], %s138
          %s140 = sadd.s32 %s27, %s136
          %s141 = smul.addr %s140, 128
          %s142 = scalar_lea.hbm %s0, %s141
          %s143 = sshll.u32 [#allocation2], 4
          %s144 = int_to_ptr.vmem [resolvable:$true] %s143
          %149 = dma.hbm_to_vmem [thread:$0]  %s142, 4096, %s144, [#allocation3], 128, 128, 8
        $region16: #{tpu_custom_call.1} parent=11 // pred_fallthru
          _
      $region12: #{tpu_custom_call.1} parent=5 // pred_fallthru
        _
      %p150 = scmp.lt.s32.totalorder %s15, 2
      // Predicated region
      $region17: #{tpu_custom_call.1} parent=5 // pred_check
        %p151 = pneg %p150
      $region18: #{tpu_custom_call.1} parent=5 // pred_check_branch
        %153 = sbr.rel (%p151) target = $region20
      $region19: #{tpu_custom_call.1} parent=5 // pred_region
        // Predicated region
        $region21: #{tpu_custom_call.1} parent=19 // pred_check
          %p154 = pneg %p84
        $region22: #{tpu_custom_call.1} parent=19 // pred_check_branch
          %156 = sbr.rel (%p154) target = $region24
        $region23: #{tpu_custom_call.1} parent=19 // pred_region
          %s157 = sand.u32 %s74, 1
          %s158 = scalar_lea.sflag [#allocation6], %s157
          %s159 = sand.u32 %s74, 1
          %s160 = smul.addr %s159, 256
          %s161 = scalar_lea.vmem [#allocation5], %s160
          %s162 = smul.u32 16, %s24
          %s163 = smul.u32 2, %s23
          %s165 = ssub.s32 4096, 4096
          %166 = vsyncadd %s158, %s165
          %s167 = smul.addr %s162, 4
          %s168 = sadd.s32 %s163, %s167
          %s169 = smul.addr %s168, 128
          %s170 = scalar_lea.hbm %s1, %s169
          %s171 = sshll.u32 %s161, 4
          %s172 = int_to_ptr.vmem [resolvable:$true] %s171
          %177 = dma.hbm_to_vmem [thread:$0]  %s170, 4096, %s172, %s158, 512, 256, 16
        $region24: #{tpu_custom_call.1} parent=19 // pred_fallthru
          _
      $region20: #{tpu_custom_call.1} parent=5 // pred_fallthru
        _
      %p178 = scmp.le.s32.totalorder 1, %s15
      %p179 = scmp.lt.s32.totalorder %s15, 3
      %p180 = pnand %p178, %p179
      %p181 = pneg %p180
      // Predicated region
      $region25: #{tpu_custom_call.1} parent=5 // pred_check
        _
      $region26: #{tpu_custom_call.1} parent=5 // pred_check_branch
        %183 = sbr.rel (%p180) target = $region28
      $region27: #{tpu_custom_call.1} parent=5 // pred_region
        %s184 = ssub.s32 %s15, 1
        // Predicated region
        $region29: #{tpu_custom_call.1} parent=27 // pred_check
          %p185 = pneg %p62
        $region30: #{tpu_custom_call.1} parent=27 // pred_check_branch
          %187 = sbr.rel (%p185) target = $region32
        $region31: #{tpu_custom_call.1} parent=27 // pred_region
          %188 = dma.done [#allocation3], 4096
        $region32: #{tpu_custom_call.1} parent=27 // pred_fallthru
          _
        %s189 = sand.u32 %s77, 1
        %s190 = scalar_lea.sflag [#allocation6], %s189
        %s191 = sand.u32 %s77, 1
        %s192 = smul.addr %s191, 256
        %s193 = scalar_lea.vmem [#allocation5], %s192
        // Predicated region
        $region33: #{tpu_custom_call.1} parent=27 // pred_check
          %p194 = pneg %p90
        $region34: #{tpu_custom_call.1} parent=27 // pred_check_branch
          %196 = sbr.rel (%p194) target = $region36
        $region35: #{tpu_custom_call.1} parent=27 // pred_region
          %197 = dma.done %s190, 4096
        $region36: #{tpu_custom_call.1} parent=27 // pred_fallthru
          _
        %p198 = pneg %p62
        %p199 = pneg %p59
        %s200 = sand.u32 %s77, 1
        %s201 = scalar_lea.sflag [#allocation6], %s200
        %s202 = sand.u32 %s77, 1
        %s203 = smul.addr %s202, 256
        %s204 = scalar_lea.vmem [#allocation5], %s203
        %p205 = pneg %p90
        %p206 = pneg %p87
        %p207 = pneg %p118
        %p208 = pneg %p115
        %s209 = sand.u32 %s105, 1
        %s210 = scalar_lea.sflag [#allocation4], %s209
        %s211 = sand.u32 %s105, 1
        %s212 = smul.addr %s211, 512
        %s213 = scalar_lea.vmem [#allocation7], %s212
        %s214 = smul.u32 32, %s25
        %s215 = smul.u32 16, %s27
        %s216 = smul.u32 2, %s26
        %s217 = smul.u32 32, %s25
        %s218 = smul.u32 2, %s26
        %v219 = vld [vmem:[#allocation2] sm:$0xff]
        %v220 = vld [vmem:[#allocation2 + $0x8] sm:$0xff]
        %v221 = vld [vmem:[#allocation2 + $0x10] sm:$0xff]
        %v222 = vld [vmem:[#allocation2 + $0x18] sm:$0xff]
        %v223 = vld [vmem:[#allocation2 + $0x20] sm:$0xff]
        %v224 = vld [vmem:[#allocation2 + $0x28] sm:$0xff]
        %v225 = vld [vmem:[#allocation2 + $0x30] sm:$0xff]
        %v226 = vld [vmem:[#allocation2 + $0x38] sm:$0xff]
        %v227 = vld [vmem:[#allocation2 + $0x40] sm:$0xff]
        %v228 = vld [vmem:[#allocation2 + $0x48] sm:$0xff]
        %v229 = vld [vmem:[#allocation2 + $0x50] sm:$0xff]
        %v230 = vld [vmem:[#allocation2 + $0x58] sm:$0xff]
        %v231 = vld [vmem:[#allocation2 + $0x60] sm:$0xff]
        %v232 = vld [vmem:[#allocation2 + $0x68] sm:$0xff]
        %v233 = vld [vmem:[#allocation2 + $0x70] sm:$0xff]
        %v234 = vld [vmem:[#allocation2 + $0x78] sm:$0xff]
        %v235 = vld [vmem:[#allocation2 + $0x80] sm:$0xff]
        %v236 = vld [vmem:[#allocation2 + $0x88] sm:$0xff]
        %v237 = vld [vmem:[#allocation2 + $0x90] sm:$0xff]
        %v238 = vld [vmem:[#allocation2 + $0x98] sm:$0xff]
        %v239 = vld [vmem:[#allocation2 + $0xa0] sm:$0xff]
        %v240 = vld [vmem:[#allocation2 + $0xa8] sm:$0xff]
        %v241 = vld [vmem:[#allocation2 + $0xb0] sm:$0xff]
        %v242 = vld [vmem:[#allocation2 + $0xb8] sm:$0xff]
        %v243 = vld [vmem:[#allocation2 + $0xc0] sm:$0xff]
        %v244 = vld [vmem:[#allocation2 + $0xc8] sm:$0xff]
        %v245 = vld [vmem:[#allocation2 + $0xd0] sm:$0xff]
        %v246 = vld [vmem:[#allocation2 + $0xd8] sm:$0xff]
        %v247 = vld [vmem:[#allocation2 + $0xe0] sm:$0xff]
        %v248 = vld [vmem:[#allocation2 + $0xe8] sm:$0xff]
        %v249 = vld [vmem:[#allocation2 + $0xf0] sm:$0xff]
        %v250 = vld [vmem:[#allocation2 + $0xf8] sm:$0xff]
        %v251 = vld [vmem:[%s193] sm:$0xff]
        %v252 = vld [vmem:[%s193 + $0x8] sm:$0xff]
        %v253 = vld [vmem:[%s193 + $0x10] sm:$0xff]
        %v254 = vld [vmem:[%s193 + $0x18] sm:$0xff]
        %v255 = vld [vmem:[%s193 + $0x20] sm:$0xff]
        %v256 = vld [vmem:[%s193 + $0x28] sm:$0xff]
        %v257 = vld [vmem:[%s193 + $0x30] sm:$0xff]
        %v258 = vld [vmem:[%s193 + $0x38] sm:$0xff]
        %v259 = vld [vmem:[%s193 + $0x40] sm:$0xff]
        %v260 = vld [vmem:[%s193 + $0x48] sm:$0xff]
        %v261 = vld [vmem:[%s193 + $0x50] sm:$0xff]
        %v262 = vld [vmem:[%s193 + $0x58] sm:$0xff]
        %v263 = vld [vmem:[%s193 + $0x60] sm:$0xff]
        %v264 = vld [vmem:[%s193 + $0x68] sm:$0xff]
        %v265 = vld [vmem:[%s193 + $0x70] sm:$0xff]
        %v266 = vld [vmem:[%s193 + $0x78] sm:$0xff]
        %v267 = vld [vmem:[%s193 + $0x80] sm:$0xff]
        %v268 = vld [vmem:[%s193 + $0x88] sm:$0xff]
        %v269 = vld [vmem:[%s193 + $0x90] sm:$0xff]
        %v270 = vld [vmem:[%s193 + $0x98] sm:$0xff]
        %v271 = vld [vmem:[%s193 + $0xa0] sm:$0xff]
        %v272 = vld [vmem:[%s193 + $0xa8] sm:$0xff]
        %v273 = vld [vmem:[%s193 + $0xb0] sm:$0xff]
        %v274 = vld [vmem:[%s193 + $0xb8] sm:$0xff]
        %v275 = vld [vmem:[%s193 + $0xc0] sm:$0xff]
        %v276 = vld [vmem:[%s193 + $0xc8] sm:$0xff]
        %v277 = vld [vmem:[%s193 + $0xd0] sm:$0xff]
        %v278 = vld [vmem:[%s193 + $0xd8] sm:$0xff]
        %v279 = vld [vmem:[%s193 + $0xe0] sm:$0xff]
        %v280 = vld [vmem:[%s193 + $0xe8] sm:$0xff]
        %v281 = vld [vmem:[%s193 + $0xf0] sm:$0xff]
        %v282 = vld [vmem:[%s193 + $0xf8] sm:$0xff]
        %283 = vmatprep.subr.mxu0 %v252
        %284 = vmatpush1.msra.mxu0 %v251
        %285 = vmatprep.subr.mxu0 %v254
        %286 = vmatpush1.msra.mxu0 %v253
        %287 = vmatprep.subr.mxu0 %v256
        %288 = vmatpush1.msra.mxu0 %v255
        %289 = vmatprep.subr.mxu0 %v258
        %290 = vmatpush1.msra.mxu0 %v257
        %291 = vmatprep.subr.mxu0 %v260
        %292 = vmatpush1.msra.mxu0 %v259
        %293 = vmatprep.subr.mxu0 %v262
        %294 = vmatpush1.msra.mxu0 %v261
        %295 = vmatprep.subr.mxu0 %v264
        %296 = vmatpush1.msra.mxu0 %v263
        %297 = vmatprep.subr.mxu0 %v266
        %298 = vmatpush1.msra.mxu0 %v265
        %299 = vmatprep.subr.mxu0 %v268
        %300 = vmatpush1.msra.mxu0 %v267
        %301 = vmatprep.subr.mxu0 %v270
        %302 = vmatpush1.msra.mxu0 %v269
        %303 = vmatprep.subr.mxu0 %v272
        %304 = vmatpush1.msra.mxu0 %v271
        %305 = vmatprep.subr.mxu0 %v274
        %306 = vmatpush1.msra.mxu0 %v273
        %307 = vmatprep.subr.mxu0 %v276
        %308 = vmatpush1.msra.mxu0 %v275
        %309 = vmatprep.subr.mxu0 %v278
        %310 = vmatpush1.msra.mxu0 %v277
        %311 = vmatprep.subr.mxu0 %v280
        %312 = vmatpush1.msra.mxu0 %v279
        %313 = vmatprep.subr.mxu0 %v282
        %314 = vmatpush1.msra.mxu0 %v281
        %315 = vmatprep.subr.mxu0 0.0
        %316 = vmatpush1.msra.mxu0 0.0
        %317 = vmatprep.subr.mxu0 0.0
        %318 = vmatpush1.msra.mxu0 0.0
        %319 = vmatprep.subr.mxu0 0.0
        %320 = vmatpush1.msra.mxu0 0.0
        %321 = vmatprep.subr.mxu0 0.0
        %322 = vmatpush1.msra.mxu0 0.0
        %323 = vmatprep.subr.mxu0 0.0
        %324 = vmatpush1.msra.mxu0 0.0
        %325 = vmatprep.subr.mxu0 0.0
        %326 = vmatpush1.msra.mxu0 0.0
        %327 = vmatprep.subr.mxu0 0.0
        %328 = vmatpush1.msra.mxu0 0.0
        %329 = vmatprep.subr.mxu0 0.0
        %330 = vmatpush1.msra.mxu0 0.0
        %331 = vmatprep.subr.mxu0 0.0
        %332 = vmatpush1.msra.mxu0 0.0
        %333 = vmatprep.subr.mxu0 0.0
        %334 = vmatpush1.msra.mxu0 0.0
        %335 = vmatprep.subr.mxu0 0.0
        %336 = vmatpush1.msra.mxu0 0.0
        %337 = vmatprep.subr.mxu0 0.0
        %338 = vmatpush1.msra.mxu0 0.0
        %339 = vmatprep.subr.mxu0 0.0
        %340 = vmatpush1.msra.mxu0 0.0
        %341 = vmatprep.subr.mxu0 0.0
        %342 = vmatpush1.msra.mxu0 0.0
        %343 = vmatprep.subr.mxu0 0.0
        %344 = vmatpush1.msra.mxu0 0.0
        %345 = vmatprep.subr.mxu0 0.0
        %346 = vmatpush1.msra.mxu0 0.0
        %347 = vmatprep.mubr.f32.mxu0 0.0
        %348 = vmatmul.mubr.f32.gmra.mrb[0].mxu0 %v219
        %v349 = vpop.f32.mrb[0].mxu0
        %v350 = vadd.f32 0.0, %v349
        %v351 = vpop.f32.mrb[0].mxu0
        %v352 = vadd.f32 0.0, %v351
        %353 = vmatprep.mubr.f32.mxu0 0.0
        %354 = vmatmul.mubr.f32.gmra.mrb[0].mxu0 %v220
        %v355 = vpop.f32.mrb[0].mxu0
        %v356 = vadd.f32 0.0, %v355
        %v357 = vpop.f32.mrb[0].mxu0
        %v358 = vadd.f32 0.0, %v357
        %359 = vmatprep.mubr.f32.mxu0 0.0
        %360 = vmatmul.mubr.f32.gmra.mrb[0].mxu0 %v221
        %v361 = vpop.f32.mrb[0].mxu0
        %v362 = vadd.f32 0.0, %v361
        %v363 = vpop.f32.mrb[0].mxu0
        %v364 = vadd.f32 0.0, %v363
        %365 = vmatprep.mubr.f32.mxu0 0.0
        %366 = vmatmul.mubr.f32.gmra.mrb[0].mxu0 %v222
        %v367 = vpop.f32.mrb[0].mxu0
        %v368 = vadd.f32 0.0, %v367
        %v369 = vpop.f32.mrb[0].mxu0
        %v370 = vadd.f32 0.0, %v369
        %371 = vmatprep.mubr.f32.mxu0 0.0
        %372 = vmatmul.mubr.f32.gmra.mrb[0].mxu0 %v223
        %v373 = vpop.f32.mrb[0].mxu0
        %v374 = vadd.f32 0.0, %v373
        %v375 = vpop.f32.mrb[0].mxu0
        %v376 = vadd.f32 0.0, %v375
        %377 = vmatprep.mubr.f32.mxu0 0.0
        %378 = vmatmul.mubr.f32.gmra.mrb[0].mxu0 %v224
        %v379 = vpop.f32.mrb[0].mxu0
        %v380 = vadd.f32 0.0, %v379
        %v381 = vpop.f32.mrb[0].mxu0
        %v382 = vadd.f32 0.0, %v381
        %383 = vmatprep.mubr.f32.mxu0 0.0
        %384 = vmatmul.mubr.f32.gmra.mrb[0].mxu0 %v225
        %v385 = vpop.f32.mrb[0].mxu0
        %v386 = vadd.f32 0.0, %v385
        %v387 = vpop.f32.mrb[0].mxu0
        %v388 = vadd.f32 0.0, %v387
        %389 = vmatprep.mubr.f32.mxu0 0.0
        %390 = vmatmul.mubr.f32.gmra.mrb[0].mxu0 %v226
        %v391 = vpop.f32.mrb[0].mxu0
        %v392 = vadd.f32 0.0, %v391
        %v393 = vpop.f32.mrb[0].mxu0
        %v394 = vadd.f32 0.0, %v393
        %395 = vmatprep.mubr.f32.mxu0 0.0
        %396 = vmatmul.mubr.f32.gmra.mrb[0].mxu0 %v227
        %v397 = vpop.f32.mrb[0].mxu0
        %v398 = vadd.f32 0.0, %v397
        %v399 = vpop.f32.mrb[0].mxu0
        %v400 = vadd.f32 0.0, %v399
        %401 = vmatprep.mubr.f32.mxu0 0.0
        %402 = vmatmul.mubr.f32.gmra.mrb[0].mxu0 %v228
        %v403 = vpop.f32.mrb[0].mxu0
        %v404 = vadd.f32 0.0, %v403
        %v405 = vpop.f32.mrb[0].mxu0
        %v406 = vadd.f32 0.0, %v405
        %407 = vmatprep.mubr.f32.mxu0 0.0
        %408 = vmatmul.mubr.f32.gmra.mrb[0].mxu0 %v229
        %v409 = vpop.f32.mrb[0].mxu0
        %v410 = vadd.f32 0.0, %v409
        %v411 = vpop.f32.mrb[0].mxu0
        %v412 = vadd.f32 0.0, %v411
        %413 = vmatprep.mubr.f32.mxu0 0.0
        %414 = vmatmul.mubr.f32.gmra.mrb[0].mxu0 %v230
        %v415 = vpop.f32.mrb[0].mxu0
        %v416 = vadd.f32 0.0, %v415
        %v417 = vpop.f32.mrb[0].mxu0
        %v418 = vadd.f32 0.0, %v417
        %419 = vmatprep.mubr.f32.mxu0 0.0
        %420 = vmatmul.mubr.f32.gmra.mrb[0].mxu0 %v231
        %v421 = vpop.f32.mrb[0].mxu0
        %v422 = vadd.f32 0.0, %v421
        %v423 = vpop.f32.mrb[0].mxu0
        %v424 = vadd.f32 0.0, %v423
        %425 = vmatprep.mubr.f32.mxu0 0.0
        %426 = vmatmul.mubr.f32.gmra.mrb[0].mxu0 %v232
        %v427 = vpop.f32.mrb[0].mxu0
        %v428 = vadd.f32 0.0, %v427
        %v429 = vpop.f32.mrb[0].mxu0
        %v430 = vadd.f32 0.0, %v429
        %431 = vmatprep.mubr.f32.mxu0 0.0
        %432 = vmatmul.mubr.f32.gmra.mrb[0].mxu0 %v233
        %v433 = vpop.f32.mrb[0].mxu0
        %v434 = vadd.f32 0.0, %v433
        %v435 = vpop.f32.mrb[0].mxu0
        %v436 = vadd.f32 0.0, %v435
        %437 = vmatprep.mubr.f32.mxu0 0.0
        %438 = vmatmul.mubr.f32.gmra.mrb[0].mxu0 %v234
        %v439 = vpop.f32.mrb[0].mxu0
        %v440 = vadd.f32 0.0, %v439
        %v441 = vpop.f32.mrb[0].mxu0
        %v442 = vadd.f32 0.0, %v441
        %443 = vmatprep.mubr.f32.mxu0 0.0
        %444 = vmatmul.mubr.f32.gmra.mrb[0].mxu0 %v235
        %v445 = vpop.f32.mrb[0].mxu0
        %v446 = vadd.f32 0.0, %v445
        %v447 = vpop.f32.mrb[0].mxu0
        %v448 = vadd.f32 0.0, %v447
        %449 = vmatprep.mubr.f32.mxu0 0.0
        %450 = vmatmul.mubr.f32.gmra.mrb[0].mxu0 %v236
        %v451 = vpop.f32.mrb[0].mxu0
        %v452 = vadd.f32 0.0, %v451
        %v453 = vpop.f32.mrb[0].mxu0
        %v454 = vadd.f32 0.0, %v453
        %455 = vmatprep.mubr.f32.mxu0 0.0
        %456 = vmatmul.mubr.f32.gmra.mrb[0].mxu0 %v237
        %v457 = vpop.f32.mrb[0].mxu0
        %v458 = vadd.f32 0.0, %v457
        %v459 = vpop.f32.mrb[0].mxu0
        %v460 = vadd.f32 0.0, %v459
        %461 = vmatprep.mubr.f32.mxu0 0.0
        %462 = vmatmul.mubr.f32.gmra.mrb[0].mxu0 %v238
        %v463 = vpop.f32.mrb[0].mxu0
        %v464 = vadd.f32 0.0, %v463
        %v465 = vpop.f32.mrb[0].mxu0
        %v466 = vadd.f32 0.0, %v465
        %467 = vmatprep.mubr.f32.mxu0 0.0
        %468 = vmatmul.mubr.f32.gmra.mrb[0].mxu0 %v239
        %v469 = vpop.f32.mrb[0].mxu0
        %v470 = vadd.f32 0.0, %v469
        %v471 = vpop.f32.mrb[0].mxu0
        %v472 = vadd.f32 0.0, %v471
        %473 = vmatprep.mubr.f32.mxu0 0.0
        %474 = vmatmul.mubr.f32.gmra.mrb[0].mxu0 %v240
        %v475 = vpop.f32.mrb[0].mxu0
        %v476 = vadd.f32 0.0, %v475
        %v477 = vpop.f32.mrb[0].mxu0
        %v478 = vadd.f32 0.0, %v477
        %479 = vmatprep.mubr.f32.mxu0 0.0
        %480 = vmatmul.mubr.f32.gmra.mrb[0].mxu0 %v241
        %v481 = vpop.f32.mrb[0].mxu0
        %v482 = vadd.f32 0.0, %v481
        %v483 = vpop.f32.mrb[0].mxu0
        %v484 = vadd.f32 0.0, %v483
        %485 = vmatprep.mubr.f32.mxu0 0.0
        %486 = vmatmul.mubr.f32.gmra.mrb[0].mxu0 %v242
        %v487 = vpop.f32.mrb[0].mxu0
        %v488 = vadd.f32 0.0, %v487
        %v489 = vpop.f32.mrb[0].mxu0
        %v490 = vadd.f32 0.0, %v489
        %491 = vmatprep.mubr.f32.mxu0 0.0
        %492 = vmatmul.mubr.f32.gmra.mrb[0].mxu0 %v243
        %v493 = vpop.f32.mrb[0].mxu0
        %v494 = vadd.f32 0.0, %v493
        %v495 = vpop.f32.mrb[0].mxu0
        %v496 = vadd.f32 0.0, %v495
        %497 = vmatprep.mubr.f32.mxu0 0.0
        %498 = vmatmul.mubr.f32.gmra.mrb[0].mxu0 %v244
        %v499 = vpop.f32.mrb[0].mxu0
        %v500 = vadd.f32 0.0, %v499
        %v501 = vpop.f32.mrb[0].mxu0
        %v502 = vadd.f32 0.0, %v501
        %503 = vmatprep.mubr.f32.mxu0 0.0
        %504 = vmatmul.mubr.f32.gmra.mrb[0].mxu0 %v245
        %v505 = vpop.f32.mrb[0].mxu0
        %v506 = vadd.f32 0.0, %v505
        %v507 = vpop.f32.mrb[0].mxu0
        %v508 = vadd.f32 0.0, %v507
        %509 = vmatprep.mubr.f32.mxu0 0.0
        %510 = vmatmul.mubr.f32.gmra.mrb[0].mxu0 %v246
        %v511 = vpop.f32.mrb[0].mxu0
        %v512 = vadd.f32 0.0, %v511
        %v513 = vpop.f32.mrb[0].mxu0
        %v514 = vadd.f32 0.0, %v513
        %515 = vmatprep.mubr.f32.mxu0 0.0
        %516 = vmatmul.mubr.f32.gmra.mrb[0].mxu0 %v247
        %v517 = vpop.f32.mrb[0].mxu0
        %v518 = vadd.f32 0.0, %v517
        %v519 = vpop.f32.mrb[0].mxu0
        %v520 = vadd.f32 0.0, %v519
        %521 = vmatprep.mubr.f32.mxu0 0.0
        %522 = vmatmul.mubr.f32.gmra.mrb[0].mxu0 %v248
        %v523 = vpop.f32.mrb[0].mxu0
        %v524 = vadd.f32 0.0, %v523
        %v525 = vpop.f32.mrb[0].mxu0
        %v526 = vadd.f32 0.0, %v525
        %527 = vmatprep.mubr.f32.mxu0 0.0
        %528 = vmatmul.mubr.f32.gmra.mrb[0].mxu0 %v249
        %v529 = vpop.f32.mrb[0].mxu0
        %v530 = vadd.f32 0.0, %v529
        %v531 = vpop.f32.mrb[0].mxu0
        %v532 = vadd.f32 0.0, %v531
        %533 = vmatprep.mubr.f32.mxu0 0.0
        %534 = vmatmul.mubr.f32.gmra.mrb[0].mxu0 %v250
        %v535 = vpop.f32.mrb[0].mxu0
        %v536 = vadd.f32 0.0, %v535
        %v537 = vpop.f32.mrb[0].mxu0
        %v538 = vadd.f32 0.0, %v537
        %539 = vdwg.mxu0
        %v540 = vmul.f32 %v350, %v350
        %v541 = vmul.f32 %v352, %v352
        %v542 = vmul.f32 %v356, %v356
        %v543 = vmul.f32 %v358, %v358
        %v544 = vmul.f32 %v362, %v362
        %v545 = vmul.f32 %v364, %v364
        %v546 = vmul.f32 %v368, %v368
        %v547 = vmul.f32 %v370, %v370
        %v548 = vmul.f32 %v374, %v374
        %v549 = vmul.f32 %v376, %v376
        %v550 = vmul.f32 %v380, %v380
        %v551 = vmul.f32 %v382, %v382
        %v552 = vmul.f32 %v386, %v386
        %v553 = vmul.f32 %v388, %v388
        %v554 = vmul.f32 %v392, %v392
        %v555 = vmul.f32 %v394, %v394
        %v556 = vmul.f32 %v398, %v398
        %v557 = vmul.f32 %v400, %v400
        %v558 = vmul.f32 %v404, %v404
        %v559 = vmul.f32 %v406, %v406
        %v560 = vmul.f32 %v410, %v410
        %v561 = vmul.f32 %v412, %v412
        %v562 = vmul.f32 %v416, %v416
        %v563 = vmul.f32 %v418, %v418
        %v564 = vmul.f32 %v422, %v422
        %v565 = vmul.f32 %v424, %v424
        %v566 = vmul.f32 %v428, %v428
        %v567 = vmul.f32 %v430, %v430
        %v568 = vmul.f32 %v434, %v434
        %v569 = vmul.f32 %v436, %v436
        %v570 = vmul.f32 %v440, %v440
        %v571 = vmul.f32 %v442, %v442
        %v572 = vmul.f32 %v446, %v446
        %v573 = vmul.f32 %v448, %v448
        %v574 = vmul.f32 %v452, %v452
        %v575 = vmul.f32 %v454, %v454
        %v576 = vmul.f32 %v458, %v458
        %v577 = vmul.f32 %v460, %v460
        %v578 = vmul.f32 %v464, %v464
        %v579 = vmul.f32 %v466, %v466
        %v580 = vmul.f32 %v470, %v470
        %v581 = vmul.f32 %v472, %v472
        %v582 = vmul.f32 %v476, %v476
        %v583 = vmul.f32 %v478, %v478
        %v584 = vmul.f32 %v482, %v482
        %v585 = vmul.f32 %v484, %v484
        %v586 = vmul.f32 %v488, %v488
        %v587 = vmul.f32 %v490, %v490
        %v588 = vmul.f32 %v494, %v494
        %v589 = vmul.f32 %v496, %v496
        %v590 = vmul.f32 %v500, %v500
        %v591 = vmul.f32 %v502, %v502
        %v592 = vmul.f32 %v506, %v506
        %v593 = vmul.f32 %v508, %v508
        %v594 = vmul.f32 %v512, %v512
        %v595 = vmul.f32 %v514, %v514
        %v596 = vmul.f32 %v518, %v518
        %v597 = vmul.f32 %v520, %v520
        %v598 = vmul.f32 %v524, %v524
        %v599 = vmul.f32 %v526, %v526
        %v600 = vmul.f32 %v530, %v530
        %v601 = vmul.f32 %v532, %v532
        %v602 = vmul.f32 %v536, %v536
        %v603 = vmul.f32 %v538, %v538
        %v604 = vmul.f32 %v350, %v540
        %v605 = vmul.f32 %v352, %v541
        %v606 = vmul.f32 %v356, %v542
        %v607 = vmul.f32 %v358, %v543
        %v608 = vmul.f32 %v362, %v544
        %v609 = vmul.f32 %v364, %v545
        %v610 = vmul.f32 %v368, %v546
        %v611 = vmul.f32 %v370, %v547
        %v612 = vmul.f32 %v374, %v548
        %v613 = vmul.f32 %v376, %v549
        %v614 = vmul.f32 %v380, %v550
        %v615 = vmul.f32 %v382, %v551
        %v616 = vmul.f32 %v386, %v552
        %v617 = vmul.f32 %v388, %v553
        %v618 = vmul.f32 %v392, %v554
        %v619 = vmul.f32 %v394, %v555
        %v620 = vmul.f32 %v398, %v556
        %v621 = vmul.f32 %v400, %v557
        %v622 = vmul.f32 %v404, %v558
        %v623 = vmul.f32 %v406, %v559
        %v624 = vmul.f32 %v410, %v560
        %v625 = vmul.f32 %v412, %v561
        %v626 = vmul.f32 %v416, %v562
        %v627 = vmul.f32 %v418, %v563
        %v628 = vmul.f32 %v422, %v564
        %v629 = vmul.f32 %v424, %v565
        %v630 = vmul.f32 %v428, %v566
        %v631 = vmul.f32 %v430, %v567
        %v632 = vmul.f32 %v434, %v568
        %v633 = vmul.f32 %v436, %v569
        %v634 = vmul.f32 %v440, %v570
        %v635 = vmul.f32 %v442, %v571
        %v636 = vmul.f32 %v446, %v572
        %v637 = vmul.f32 %v448, %v573
        %v638 = vmul.f32 %v452, %v574
        %v639 = vmul.f32 %v454, %v575
        %v640 = vmul.f32 %v458, %v576
        %v641 = vmul.f32 %v460, %v577
        %v642 = vmul.f32 %v464, %v578
        %v643 = vmul.f32 %v466, %v579
        %v644 = vmul.f32 %v470, %v580
        %v645 = vmul.f32 %v472, %v581
        %v646 = vmul.f32 %v476, %v582
        %v647 = vmul.f32 %v478, %v583
        %v648 = vmul.f32 %v482, %v584
        %v649 = vmul.f32 %v484, %v585
        %v650 = vmul.f32 %v488, %v586
        %v651 = vmul.f32 %v490, %v587
        %v652 = vmul.f32 %v494, %v588
        %v653 = vmul.f32 %v496, %v589
        %v654 = vmul.f32 %v500, %v590
        %v655 = vmul.f32 %v502, %v591
        %v656 = vmul.f32 %v506, %v592
        %v657 = vmul.f32 %v508, %v593
        %v658 = vmul.f32 %v512, %v594
        %v659 = vmul.f32 %v514, %v595
        %v660 = vmul.f32 %v518, %v596
        %v661 = vmul.f32 %v520, %v597
        %v662 = vmul.f32 %v524, %v598
        %v663 = vmul.f32 %v526, %v599
        %v664 = vmul.f32 %v530, %v600
        %v665 = vmul.f32 %v532, %v601
        %v666 = vmul.f32 %v536, %v602
        %v667 = vmul.f32 %v538, %v603
        %668 = vst [vmem:[%s213] sm:$0xff] %v604
        %669 = vst [vmem:[%s213 + $0x8] sm:$0xff] %v605
        %670 = vst [vmem:[%s213 + $0x10] sm:$0xff] %v606
        %671 = vst [vmem:[%s213 + $0x18] sm:$0xff] %v607
        %672 = vst [vmem:[%s213 + $0x20] sm:$0xff] %v608
        %673 = vst [vmem:[%s213 + $0x28] sm:$0xff] %v609
        %674 = vst [vmem:[%s213 + $0x30] sm:$0xff] %v610
        %675 = vst [vmem:[%s213 + $0x38] sm:$0xff] %v611
        %676 = vst [vmem:[%s213 + $0x40] sm:$0xff] %v612
        %677 = vst [vmem:[%s213 + $0x48] sm:$0xff] %v613
        %678 = vst [vmem:[%s213 + $0x50] sm:$0xff] %v614
        %679 = vst [vmem:[%s213 + $0x58] sm:$0xff] %v615
        %680 = vst [vmem:[%s213 + $0x60] sm:$0xff] %v616
        %681 = vst [vmem:[%s213 + $0x68] sm:$0xff] %v617
        %682 = vst [vmem:[%s213 + $0x70] sm:$0xff] %v618
        %683 = vst [vmem:[%s213 + $0x78] sm:$0xff] %v619
        %684 = vst [vmem:[%s213 + $0x80] sm:$0xff] %v620
        %685 = vst [vmem:[%s213 + $0x88] sm:$0xff] %v621
        %686 = vst [vmem:[%s213 + $0x90] sm:$0xff] %v622
        %687 = vst [vmem:[%s213 + $0x98] sm:$0xff] %v623
        %688 = vst [vmem:[%s213 + $0xa0] sm:$0xff] %v624
        %689 = vst [vmem:[%s213 + $0xa8] sm:$0xff] %v625
        %690 = vst [vmem:[%s213 + $0xb0] sm:$0xff] %v626
        %691 = vst [vmem:[%s213 + $0xb8] sm:$0xff] %v627
        %692 = vst [vmem:[%s213 + $0xc0] sm:$0xff] %v628
        %693 = vst [vmem:[%s213 + $0xc8] sm:$0xff] %v629
        %694 = vst [vmem:[%s213 + $0xd0] sm:$0xff] %v630
        %695 = vst [vmem:[%s213 + $0xd8] sm:$0xff] %v631
        %696 = vst [vmem:[%s213 + $0xe0] sm:$0xff] %v632
        %697 = vst [vmem:[%s213 + $0xe8] sm:$0xff] %v633
        %698 = vst [vmem:[%s213 + $0xf0] sm:$0xff] %v634
        %699 = vst [vmem:[%s213 + $0xf8] sm:$0xff] %v635
        %700 = vst [vmem:[%s213 + $0x100] sm:$0xff] %v636
        %701 = vst [vmem:[%s213 + $0x108] sm:$0xff] %v637
        %702 = vst [vmem:[%s213 + $0x110] sm:$0xff] %v638
        %703 = vst [vmem:[%s213 + $0x118] sm:$0xff] %v639
        %704 = vst [vmem:[%s213 + $0x120] sm:$0xff] %v640
        %705 = vst [vmem:[%s213 + $0x128] sm:$0xff] %v641
        %706 = vst [vmem:[%s213 + $0x130] sm:$0xff] %v642
        %707 = vst [vmem:[%s213 + $0x138] sm:$0xff] %v643
        %708 = vst [vmem:[%s213 + $0x140] sm:$0xff] %v644
        %709 = vst [vmem:[%s213 + $0x148] sm:$0xff] %v645
        %710 = vst [vmem:[%s213 + $0x150] sm:$0xff] %v646
        %711 = vst [vmem:[%s213 + $0x158] sm:$0xff] %v647
        %712 = vst [vmem:[%s213 + $0x160] sm:$0xff] %v648
        %713 = vst [vmem:[%s213 + $0x168] sm:$0xff] %v649
        %714 = vst [vmem:[%s213 + $0x170] sm:$0xff] %v650
        %715 = vst [vmem:[%s213 + $0x178] sm:$0xff] %v651
        %716 = vst [vmem:[%s213 + $0x180] sm:$0xff] %v652
        %717 = vst [vmem:[%s213 + $0x188] sm:$0xff] %v653
        %718 = vst [vmem:[%s213 + $0x190] sm:$0xff] %v654
        %719 = vst [vmem:[%s213 + $0x198] sm:$0xff] %v655
        %720 = vst [vmem:[%s213 + $0x1a0] sm:$0xff] %v656
        %721 = vst [vmem:[%s213 + $0x1a8] sm:$0xff] %v657
        %722 = vst [vmem:[%s213 + $0x1b0] sm:$0xff] %v658
        %723 = vst [vmem:[%s213 + $0x1b8] sm:$0xff] %v659
        %724 = vst [vmem:[%s213 + $0x1c0] sm:$0xff] %v660
        %725 = vst [vmem:[%s213 + $0x1c8] sm:$0xff] %v661
        %726 = vst [vmem:[%s213 + $0x1d0] sm:$0xff] %v662
        %727 = vst [vmem:[%s213 + $0x1d8] sm:$0xff] %v663
        %728 = vst [vmem:[%s213 + $0x1e0] sm:$0xff] %v664
        %729 = vst [vmem:[%s213 + $0x1e8] sm:$0xff] %v665
        %730 = vst [vmem:[%s213 + $0x1f0] sm:$0xff] %v666
        %731 = vst [vmem:[%s213 + $0x1f8] sm:$0xff] %v667
        %s732 = sand.u32 %s105, 1
        %s733 = scalar_lea.sflag [#allocation4], %s732
        %s734 = sand.u32 %s105, 1
        %s735 = smul.addr %s734, 512
        %s736 = scalar_lea.vmem [#allocation7], %s735
        // Predicated region
        $region37: #{tpu_custom_call.1} parent=27 // pred_check
          %p737 = pneg %p115
        $region38: #{tpu_custom_call.1} parent=27 // pred_check_branch
          %739 = sbr.rel (%p737) target = $region40
        $region39: #{tpu_custom_call.1} parent=27 // pred_region
          %s740 = smul.u32 32, %s25
          %s741 = smul.u32 2, %s26
          %s743 = ssub.s32 8192, 8192
          %744 = vsyncadd %s733, %s743
          %s745 = smul.addr %s740, 4
          %s746 = sadd.s32 %s741, %s745
          %s747 = smul.addr %s746, 128
          %s748 = scalar_lea.hbm %s2, %s747
          %s749 = sshll.u32 %s736, 4
          %s750 = int_to_ptr.vmem [resolvable:$true] %s749
          %755 = dma.vmem_to_hbm [thread:$0]  %s750, 8192, %s748, %s733, 256, 512, 16
        $region40: #{tpu_custom_call.1} parent=27 // pred_fallthru
          _
      $region28: #{tpu_custom_call.1} parent=5 // pred_fallthru
        _
      %p756 = scmp.le.s32.totalorder 2, %s15
      // Predicated region
      $region41: #{tpu_custom_call.1} parent=5 // pred_check
        %p757 = pneg %p756
      $region42: #{tpu_custom_call.1} parent=5 // pred_check_branch
        %759 = sbr.rel (%p757) target = $region44
      $region43: #{tpu_custom_call.1} parent=5 // pred_region
        %s760 = ssub.s32 %s15, 2
        // Predicated region
        $region45: #{tpu_custom_call.1} parent=43 // pred_check
          %p761 = pneg %p121
        $region46: #{tpu_custom_call.1} parent=43 // pred_check_branch
          %763 = sbr.rel (%p761) target = $region48
        $region47: #{tpu_custom_call.1} parent=43 // pred_region
          %s764 = sand.u32 %s106, 1
          %s765 = scalar_lea.sflag [#allocation4], %s764
          %s766 = sand.u32 %s106, 1
          %s767 = smul.addr %s766, 512
          %s768 = scalar_lea.vmem [#allocation7], %s767
          %769 = dma.done %s765, 8192
        $region48: #{tpu_custom_call.1} parent=43 // pred_fallthru
          _
      $region44: #{tpu_custom_call.1} parent=5 // pred_fallthru
        _
    $region6: #{tpu_custom_call.1} parent=1 // loop_footer
      %s19 = sadd.s32 1, %s15
    $region7: #{tpu_custom_call.1} parent=1 // loop_footer_branch
      %14 = sbr.rel target = $region3
    $region8: #{tpu_custom_call.1} parent=1 // loop_exit
      _
    %770 = vsyncpa [#allocation3], 1
    %s771 = scalar_lea.sflag [#allocation3], 1
    %772 = vsyncpa %s771, 1
    %773 = vsyncpa [#allocation6], 1
    %s774 = scalar_lea.sflag [#allocation6], 1
    %775 = vsyncpa %s774, 1
    %776 = vsyncpa [#allocation4], 1
    %s777 = scalar_lea.sflag [#allocation4], 1
    %778 = vsyncpa %s777, 1

</llo_original>
